<compile_context>
chip_gen: v5e
topology: v5e:2x2
jax: 0.10.0
libtpu: 0.0.40
codegen_flags: <defaults>
</compile_context>

<pallas_src>
import functools
import math

import jax
import jax.numpy as jnp
from jax.experimental import pallas as pl
from jax.experimental.pallas import tpu as pltpu

_LANE = 128
_MAX_TILE_L = 16 * 1024   # bounds the unrolled 128-lane maximum chain (<=128 ops)
_MAX_TILE_M = 8 * 1024    # avoids pathological row counts when L is tiny


def _sublane_multiple(dtype) -> int:
    """Sublane packing multiple for the second-to-last tile dim."""
    itemsize = jnp.dtype(dtype).itemsize
    if itemsize >= 4:
        return 8
    if itemsize == 2:
        return 16
    return 32


def _min_value(dtype):
    """Identity element of max() for this dtype."""
    dtype = jnp.dtype(dtype)
    if dtype == jnp.bool_:
        raise NotImplementedError("max_seq_pool: bool inputs are not supported")
    if jnp.issubdtype(dtype, jnp.floating):
        if dtype.itemsize < 2:
            raise NotImplementedError("max_seq_pool: float8 inputs are not supported")
        return float("-inf")
    if jnp.issubdtype(dtype, jnp.integer):
        return int(jnp.iinfo(dtype).min)
    raise NotImplementedError(f"max_seq_pool: unsupported dtype {dtype}")


def _max_last_dim_kernel(x_ref, o_ref, acc_ref, *, n_l, tile_l, col_w, seq_len,
                         min_val):
    """Running max over the L grid axis using a lane-dense VMEM accumulator."""
    l = pl.program_id(1)
    # Number of valid columns in the LAST L tile (static), in (0, tile_l].
    rem_last = seq_len - (n_l - 1) * tile_l

    @pl.when(l == 0)
    def _init():
        acc_ref[...] = jnp.full(acc_ref.shape, min_val, dtype=acc_ref.dtype)

    def _update(valid_cols):
        # Pure-VPU elementwise max of col_w-wide windows into the accumulator.
        acc = acc_ref[...]
        n_full = valid_cols // col_w
        for c in range(n_full):
            acc = jnp.maximum(acc, x_ref[:, c * col_w:(c + 1) * col_w])
        tail = valid_cols - n_full * col_w
        if tail:
            if valid_cols >= col_w:
                # Overlapping, fully-valid window: no mask needed (max is idempotent).
                acc = jnp.maximum(acc, x_ref[:, valid_cols - col_w:valid_cols])
            else:
                # Fewer than col_w valid columns: mask the padded lanes once.
                xs = x_ref[:, 0:col_w]
                col = jax.lax.broadcasted_iota(jnp.int32, xs.shape, 1)
                xs = jnp.where(col < valid_cols, xs,
                               jnp.asarray(min_val, dtype=xs.dtype))
                acc = jnp.maximum(acc, xs)
        acc_ref[...] = acc

    if rem_last == tile_l:
        # L divides evenly into tiles: identical fast path on every step.
        _update(tile_l)
    else:
        @pl.when(l < n_l - 1)
        def _bulk():
            _update(tile_l)

        @pl.when(l == n_l - 1)
        def _last():
            _update(rem_last)

    @pl.when(l == n_l - 1)
    def _finalize():
        # One cross-lane reduce + one lane-dense store per M tile.
        red = jnp.max(acc_ref[...], axis=-1)              # (tile_m,)
        o_ref[...] = red.reshape(o_ref.shape).astype(o_ref.dtype)


def max_seq_pool(x: jax.Array, *, tile_m: int | None = None,
                 tile_l: int | None = None) -> jax.Array:
    """Pallas equivalent of MaxSeqPool: max over the last dimension."""
    if x.ndim < 1:
        raise ValueError("max_seq_pool expects at least 1 dimension")

    lead = x.shape[:-1]
    L = int(x.shape[-1])
    M = int(math.prod(lead))  # prod(()) == 1 handles rank-1 inputs
    if L == 0 or M == 0:
        raise ValueError("max_seq_pool: cannot reduce over an empty dimension")

    dtype = x.dtype
    itemsize = jnp.dtype(dtype).itemsize
    min_val = _min_value(dtype)
    sub = _sublane_multiple(dtype)

    x2 = x.reshape(M, L)

    # ---- per-generation VMEM budget -------------------------------------
    phys_vmem = 64 << 20                 # conservative fallback = v7x per-TC VMEM
    try:
        info = pltpu.get_tpu_info()
        phys_vmem = int(getattr(info, "vmem_capacity_bytes", phys_vmem))
    except Exception:
        pass
    # ~22% of physical VMEM per input tile (=> ~45% once double-buffered),
    # capped at 16 MiB; past that the ~0.35us/step overhead is already <<1%.
    per_tile_cap = min(16 << 20, int(phys_vmem * 0.22))

    # ---- tile_l: prefer the full row (long contiguous DMA runs) ----------
    if tile_l is None:
        if L <= _MAX_TILE_L and L * sub * itemsize <= per_tile_cap:
            tile_l = L
        else:
            cap_cols = per_tile_cap // (sub * itemsize)
            tile_l = max((min(_MAX_TILE_L, cap_cols, L) // _LANE) * _LANE, _LANE)
    else:
        tile_l = min(int(tile_l), L)
        if tile_l < L and tile_l % _LANE != 0:
            raise ValueError("tile_l must be a multiple of 128 (or cover all of L)")

    # ---- tile_m: fill remaining budget; keep >= 2 M blocks for v7x -------
    if tile_m is None:
        rows_fit = max((per_tile_cap // (tile_l * itemsize)) // sub * sub, sub)
        rows_fit = min(rows_fit, _MAX_TILE_M)
        if M > rows_fit:
            tile_m = rows_fit                       # => nm >= 2 automatically
        elif M >= 2 * sub:
            half = (M + 1) // 2                     # split so both v7x cores work
            tile_m = ((half + sub - 1) // sub) * sub
        else:
            tile_m = M                              # tiny M: single full-dim block
    else:
        tile_m = min(int(tile_m), M)
        if tile_m < M and tile_m % sub != 0:
            raise ValueError(f"tile_m must be a multiple of {sub} (or cover all of M)")

    col_w = _LANE if tile_l >= _LANE else tile_l
    n_m = -(-M // tile_m)
    n_l = -(-L // tile_l)

    # ---- explicit VMEM limit: 2x input tile + accumulator + output -------
    tile_bytes = tile_m * tile_l * itemsize
    footprint = (2 * tile_bytes + tile_m * col_w * itemsize
                 + 2 * tile_m * itemsize + (2 << 20))
    vmem_limit = int(max(min(max(footprint, 32 << 20), int(phys_vmem * 0.9)),
                         footprint))

    kernel = functools.partial(
        _max_last_dim_kernel,
        n_l=n_l, tile_l=tile_l, col_w=col_w, seq_len=L, min_val=min_val,
    )

    out = pl.pallas_call(
        kernel,
        out_shape=jax.ShapeDtypeStruct((n_m, 1, tile_m), dtype),
        grid=(n_m, n_l),
        in_specs=[pl.BlockSpec((tile_m, tile_l), lambda i, l: (i, l))],
        # Lane-dense output blocks: one unmasked row store per M tile.
        out_specs=pl.BlockSpec((1, 1, tile_m), lambda i, l: (i, 0, 0)),
        scratch_shapes=[pltpu.VMEM((tile_m, col_w), dtype)],
        compiler_params=pltpu.CompilerParams(
            dimension_semantics=("parallel", "arbitrary"),
            vmem_limit_bytes=vmem_limit,
        ),
    )(x2)

    return out.reshape(n_m * tile_m)[:M].reshape(lead)


if __name__ == "__main__":
    key = jax.random.PRNGKey(0)

    # Small shape consistent with the protscape use: (batch, channels, seq).
    B, C, L = 2, 4, 16
    x = jax.random.normal(key, (B, C, L), dtype=jnp.float32)
    y = jax.block_until_ready(max_seq_pool(x))
    ref = jnp.max(x, axis=-1)  # == torch.max(x, dim=-1)[0]
    assert y.shape == ref.shape, y.shape
    assert y.dtype == ref.dtype
    assert bool(jnp.array_equal(y, ref))

    # Non-power-of-two dims (full-dim block path, L < 128).
    x2 = jax.random.normal(jax.random.PRNGKey(0), (3, 5, 7), dtype=jnp.float32)
    y2 = jax.block_until_ready(max_seq_pool(x2))
    assert bool(jnp.array_equal(y2, jnp.max(x2, axis=-1)))

    # Forced multi-tile path: ragged L (300 % 128 != 0) and multiple M blocks.
    x3 = jax.random.normal(jax.random.PRNGKey(1), (2, 12, 300), dtype=jnp.float32)
    y3 = jax.block_until_ready(max_seq_pool(x3, tile_m=8, tile_l=128))
    assert bool(jnp.array_equal(y3, jnp.max(x3, axis=-1)))

    # bf16 path (sublane packing 16, overlapping-tail window: 160 % 128 != 0).
    x4 = jax.random.normal(jax.random.PRNGKey(2), (4, 8, 160), dtype=jnp.bfloat16)
    y4 = jax.block_until_ready(max_seq_pool(x4))
    assert bool(jnp.array_equal(y4, jnp.max(x4, axis=-1)))

    print("KERNEL_OK")
</pallas_src>

<mosaic_0001>
module attributes {stable_mosaic.version = 11 : i64} {
  func.func @_max_last_dim_kernel(%arg0: i32, %arg1: i32, %arg2: memref<8x16xf32, #tpu.memory_space<vmem>>, %arg3: memref<1x1x8xf32, #tpu.memory_space<vmem>>, %arg4: memref<8x16xf32, #tpu.memory_space<vmem>>) attributes {dimension_semantics = [#tpu.dimension_semantics<parallel>, #tpu.dimension_semantics<arbitrary>], iteration_bounds = array<i64: 1, 1>, scalar_prefetch = 0 : i64, scratch_operands = 1 : i64, tpu.core_type = #tpu.core_type<tc>, window_params = [{transform_indices = @transform_0, window_bounds = array<i64: 8, 16>}, {transform_indices = @transform_1, window_bounds = array<i64: 1, 1, 8>}]} {
    %c0_i32 = arith.constant 0 : i32
    %0 = arith.cmpi eq, %arg1, %c0_i32 : i32
    %1 = arith.extui %0 : i1 to i32
    %c0_i32_0 = arith.constant 0 : i32
    %2 = arith.cmpi ne, %1, %c0_i32_0 : i32
    scf.if %2 {
      %cst = arith.constant 0xFF800000 : f32
      %10 = vector.broadcast %cst : f32 to vector<8x16xf32>
      %c0_8 = arith.constant 0 : index
      %c0_9 = arith.constant 0 : index
      %11 = vector.load %arg4[%c0_8, %c0_9] : memref<8x16xf32, #tpu.memory_space<vmem>>, vector<8x16xf32>
      tpu.vector_store %arg4[%c0_8, %c0_9], %10 {strides = array<i32>} : memref<8x16xf32, #tpu.memory_space<vmem>>, vector<8x16xf32>,
    } else {
    }
    %c0 = arith.constant 0 : index
    %c0_1 = arith.constant 0 : index
    %3 = vector.load %arg4[%c0, %c0_1] : memref<8x16xf32, #tpu.memory_space<vmem>>, vector<8x16xf32>
    %c0_2 = arith.constant 0 : index
    %c0_3 = arith.constant 0 : index
    %4 = vector.load %arg2[%c0_2, %c0_3] : memref<8x16xf32, #tpu.memory_space<vmem>>, vector<8x16xf32>
    %5 = arith.maximumf %3, %4 : vector<8x16xf32>
    %c0_4 = arith.constant 0 : index
    %c0_5 = arith.constant 0 : index
    %6 = vector.load %arg4[%c0_4, %c0_5] : memref<8x16xf32, #tpu.memory_space<vmem>>, vector<8x16xf32>
    tpu.vector_store %arg4[%c0_4, %c0_5], %5 {strides = array<i32>} : memref<8x16xf32, #tpu.memory_space<vmem>>, vector<8x16xf32>,
    %c0_i32_6 = arith.constant 0 : i32
    %7 = arith.cmpi eq, %arg1, %c0_i32_6 : i32
    %8 = arith.extui %7 : i1 to i32
    %c0_i32_7 = arith.constant 0 : i32
    %9 = arith.cmpi ne, %8, %c0_i32_7 : i32
    scf.if %9 {
      %c0_8 = arith.constant 0 : index
      %c0_9 = arith.constant 0 : index
      %10 = vector.load %arg4[%c0_8, %c0_9] : memref<8x16xf32, #tpu.memory_space<vmem>>, vector<8x16xf32>
      %cst = arith.constant dense<0xFF800000> : vector<8xf32>
      %11 = vector.multi_reduction <maximumf>, %10, %cst [1] : vector<8x16xf32> to vector<8xf32>
      %12 = vector.shape_cast %11 : vector<8xf32> to vector<1x1x8xf32>
      %c0_10 = arith.constant 0 : index
      %c0_11 = arith.constant 0 : index
      %c0_12 = arith.constant 0 : index
      %13 = vector.load %arg3[%c0_10, %c0_11, %c0_12] : memref<1x1x8xf32, #tpu.memory_space<vmem>>, vector<1x1x8xf32>
      tpu.vector_store %arg3[%c0_10, %c0_11, %c0_12], %12 {strides = array<i32>} : memref<1x1x8xf32, #tpu.memory_space<vmem>>, vector<1x1x8xf32>,
    } else {
    }
    return
  }
  func.func @transform_0(%arg0: i32, %arg1: i32) -> (i32, i32) {
    %c0_i32 = arith.constant 0 : i32
    return %arg0, %arg1 : i32, i32
  }
  func.func @transform_1(%arg0: i32, %arg1: i32) -> (i32, i32, i32) {
    %c0_i32 = arith.constant 0 : i32
    %c0_i32_0 = arith.constant 0 : i32
    %c0_i32_1 = arith.constant 0 : i32
    return %arg0, %c0_i32, %c0_i32_0 : i32, i32, i32
  }
}

</mosaic_0001>

<llo_original>
// kernel: tpu_custom_call.1
$region0: #{tpu_custom_call.1}
  #allocation0 [shape = 'u32[]', space=smem, size = 0x4, offset = 0x4, fixed_abs, tag = 'smem constant byte address 0x4 - core index']
  #allocation1 [shape = 'u32[72,128]{1,0:T(1,128)}', space=vmem, size = 0x9000, scoped, tag = 'internal scratch']
  #allocation2 [shape = 'f32[8,16]{1,0:T(8,128)}', space=vmem, size = 0x1000, scoped, tag = 'scratch operand']
  %s0 = inlined_call_operand.hbm [shape: f32[8,16], index: 0, kind: input, shape index: {}]
  %s1 = inlined_call_operand.hbm [shape: f32[1,1,8], index: 1, kind: output, shape index: {}]
  %s2 = sld [smem:[#allocation0]]
  $region26: #{tpu_custom_call.1} parent=0
    _
  %s4 = ssub.s32 1, %s2
  %s5 = scalar_select 0, %s4, %s2
  $region1: #{tpu_custom_call.1} parent=0
    #allocation3 [shape = 'u8[4096]{0}', space=vmem, size = 0x1000, scoped, tag = 'input window, operand 0, single buffered']
    #allocation4 [shape = 's32[1]{0}', space=sflag, size = 0x4, scoped, tag = 'scoped memory for tpu_custom_call.1']
    #allocation5 [shape = 's32[1]{0}', space=sflag, size = 0x4, scoped, tag = 'scoped memory for tpu_custom_call.1']
    #allocation6 [shape = 'u8[512]{0}', space=vmem, size = 0x400, scoped, tag = 'output window, operand 0, single buffered']
    %6 = vsyncpa [#allocation4], 0
    %7 = vsyncpa [#allocation5], 0
    // Predicated region
    $region2: #{tpu_custom_call.1} parent=1 // pred_check
      _
    $region3: #{tpu_custom_call.1} parent=1 // pred_check_branch
      %9 = sbr.rel (0) target = $region5
    $region4: #{tpu_custom_call.1} parent=1 // pred_region
      %11 = vsyncadd [#allocation4], 0
      %s13 = sshll.u32 %s0, 4
      %s14 = int_to_ptr.hbm [resolvable:$true] %s13
      %s15 = sshll.u32 [#allocation3], 4
      %s16 = int_to_ptr.vmem [resolvable:$true] %s15
      %18 = dma.hbm_to_vmem [thread:$0]  %s14, 128, %s16, [#allocation4]
    $region5: #{tpu_custom_call.1} parent=1 // pred_fallthru
      _
    // Predicated region
    $region6: #{tpu_custom_call.1} parent=1 // pred_check
      _
    $region7: #{tpu_custom_call.1} parent=1 // pred_check_branch
      %20 = sbr.rel (0) target = $region9
    $region8: #{tpu_custom_call.1} parent=1 // pred_region
      %22 = dma.done [#allocation4], 128
    $region9: #{tpu_custom_call.1} parent=1 // pred_fallthru
      _
    %p23 = scmp.eq.s32.totalorder 0, 0
    // Predicated region
    $region10: #{tpu_custom_call.1} parent=1 // pred_check
      %p24 = pneg %p23
    $region11: #{tpu_custom_call.1} parent=1 // pred_check_branch
      %26 = sbr.rel (%p24) target = $region13
    $region12: #{tpu_custom_call.1} parent=1 // pred_region
      %vm27 = vcmask 130048
      %28 = vst.msk [vmem:[#allocation2] sm:$0xff] %vm27, -inf
    $region13: #{tpu_custom_call.1} parent=1 // pred_fallthru
      _
    %v29 = vld [vmem:[#allocation2] sm:$0xff]
    %v30 = vld [vmem:[#allocation3] sm:$0xff]
    %v31 = vmax.f32 %v29, %v30
    %vm32 = vcmask 130048
    %33 = vst.msk [vmem:[#allocation2] sm:$0xff] %vm32, %v31
    // Predicated region
    $region14: #{tpu_custom_call.1} parent=1 // pred_check
      %p34 = pneg %p23
    $region15: #{tpu_custom_call.1} parent=1 // pred_check_branch
      %36 = sbr.rel (%p34) target = $region17
    $region16: #{tpu_custom_call.1} parent=1 // pred_region
      %v37 = vld [vmem:[#allocation2] sm:$0xff]
      %v38 = vsel %vm32, %v37, -inf
      %39 = vmax.xlane.f32.xlu0 %v38
      %v40 = vpop.xlane.xlu0 %39
      %v42 = vlaneseq
      %v43 = vand.u32 %v42, 127
      %v44 = vperm.slane %v40, %v43
      %vm46 = vcmask 57344
      %47 = vst.msk [vmem:[#allocation6] sm:$0x1] %vm46, %v44
    $region17: #{tpu_custom_call.1} parent=1 // pred_fallthru
      _
    // Predicated region
    $region18: #{tpu_custom_call.1} parent=1 // pred_check
      _
    $region19: #{tpu_custom_call.1} parent=1 // pred_check_branch
      %49 = sbr.rel (0) target = $region21
    $region20: #{tpu_custom_call.1} parent=1 // pred_region
      %51 = vsyncadd [#allocation5], 0
      %s53 = sshll.u32 [#allocation6], 4
      %s54 = int_to_ptr.vmem [resolvable:$true] %s53
      %s55 = sshll.u32 %s1, 4
      %s56 = int_to_ptr.hbm [resolvable:$true] %s55
      %58 = dma.vmem_to_hbm [thread:$0]  %s54, 16, %s56, [#allocation5]
    $region21: #{tpu_custom_call.1} parent=1 // pred_fallthru
      _
    // Predicated region
    $region22: #{tpu_custom_call.1} parent=1 // pred_check
      _
    $region23: #{tpu_custom_call.1} parent=1 // pred_check_branch
      %60 = sbr.rel (0) target = $region25
    $region24: #{tpu_custom_call.1} parent=1 // pred_region
      %62 = dma.done [#allocation5], 16
    $region25: #{tpu_custom_call.1} parent=1 // pred_fallthru
      _
    %63 = vsyncpa [#allocation4], 1
    %64 = vsyncpa [#allocation5], 1

</llo_original>
